<compile_context>
chip_gen: v5e
topology: v5e:2x2
jax: 0.10.0
libtpu: 0.0.40
codegen_flags: <defaults>
</compile_context>

<pallas_src>
import numpy as np
import jax
import jax.numpy as jnp
from jax.experimental import pallas as pl
from jax.experimental.pallas import tpu as pltpu


def _round_up(a, b):
    return (a + b - 1) // b * b


def _resident_spec(block_shape):
    """BlockSpec for a grid-invariant operand: single VMEM buffer (no double-buffering)."""
    index_map = lambda *_: (0,) * len(block_shape)
    try:
        return pl.BlockSpec(block_shape, index_map, pipeline_mode=pl.Buffered(1))
    except TypeError:  # very old jax without pipeline_mode: fall back to default buffering
        return pl.BlockSpec(block_shape, index_map)


def _vmem_limit_cap():
    """Per-generation ceiling for vmem_limit_bytes, leaving headroom for Mosaic
    internal scratch: 48 MiB when physical VMEM is 64 MiB (v7x), else 96 MiB
    (v5e / v6e have 128 MiB)."""
    try:
        cap = int(pltpu.get_tpu_info().vmem_capacity_bytes)
    except Exception:
        cap = 64 * 2**20  # be conservative (v7x per-TC VMEM)
    return (48 << 20) if cap <= (64 << 20) else (96 << 20)


def _default_tile_n(N, K, dim_out_eff, in_bytes, out_bytes, budget_bytes):
    """Largest row tile in [512, 8192] (multiple of 512) whose double-buffered
    x / y tiles plus the single-buffered resident weight + bias fit the VMEM
    budget.  Footprints use lane-padded widths: a (tile_n, 32) f32 VMEM buffer
    physically occupies tile_n * 128 lanes * 4 B."""
    Kp = _round_up(K, 128)
    Dp = _round_up(dim_out_eff, 128)
    resident = _round_up(K, 8) * Dp * in_bytes + 8 * Dp * 4  # weight + bias, 1 buffer
    avail = max(budget_bytes - resident, 1 << 20)
    per_row = 2 * (Kp * in_bytes + Dp * out_bytes)           # x + out, 2 buffers each
    t = int(avail // per_row)
    t = max(512, min(8192, t))
    t = (t // 512) * 512
    t = min(t, _round_up(N, 8))   # don't over-allocate VMEM when N is small
    return max(8, t)


def _linear_kernel(x_ref, wt_ref, b_ref, o_ref):
    # x_ref : [tile_n, K]           VMEM (pipelined; last grid block may be ragged)
    # wt_ref: [K, dim_out_eff]      VMEM (grid-invariant, single-buffered)
    # b_ref : [1, dim_out_eff]      VMEM (grid-invariant, single-buffered, f32)
    # o_ref : [tile_n, dim_out_eff] VMEM (pipelined; ragged rows masked at writeback)
    acc = jnp.dot(x_ref[...], wt_ref[...], preferred_element_type=jnp.float32)
    o_ref[...] = (acc + b_ref[...]).astype(o_ref.dtype)


def linr_layer_forward(x, wt, bias, *, tile_n=None):
    """y = x @ wt + bias, computed in a Pallas TPU kernel.

    x    : [N, dim_hidden]
    wt   : [dim_hidden, dim_out]  -- weight already transposed (done once at init)
    bias : [dim_out]
    """
    N, K = x.shape
    Kw, dim_out = wt.shape
    assert Kw == K, "weight / input feature-dim mismatch"
    in_bytes = jnp.dtype(x.dtype).itemsize
    out_bytes = in_bytes

    # Output lane padding ONLY when it is cheap relative to dim_out (>= 64) and
    # dim_out is not already a multiple of 128.  Narrow outputs (e.g. 16) are
    # written unpadded: the kernel is HBM-bound, so fewer writeback bytes beats
    # lane-dense stores, and the masked vst only uses a slot with plenty of slack.
    if dim_out >= 64 and dim_out % 128 != 0:
        dim_out_eff = _round_up(dim_out, 128)
        wt = jnp.pad(wt, ((0, 0), (0, dim_out_eff - dim_out)))
        bias = jnp.pad(bias, (0, dim_out_eff - dim_out))
    else:
        dim_out_eff = dim_out
    b2 = bias.reshape(1, dim_out_eff).astype(jnp.float32)

    vmem_cap_limit = _vmem_limit_cap()
    if tile_n is None:
        tile_n = _default_tile_n(N, K, dim_out_eff, in_bytes, out_bytes,
                                 budget_bytes=vmem_cap_limit // 2)

    # Ragged N handled by Pallas: no pre-padding of x, out-of-range output rows
    # of the last block are masked at writeback (rows are independent).
    grid = (pl.cdiv(N, tile_n),)

    # Lane-padded VMEM estimate (double-buffered x/out + resident weight/bias),
    # with headroom; always set the limit (v5e scoped default is only 16 MiB).
    Kp = _round_up(K, 128)
    Dp = _round_up(dim_out_eff, 128)
    vmem_est = (2 * tile_n * (Kp * in_bytes + Dp * out_bytes)
                + _round_up(K, 8) * Dp * in_bytes + 8 * Dp * 4)
    vmem_limit = int(min(max(vmem_est * 5 // 4 + (2 << 20), 16 << 20), vmem_cap_limit))

    # TODO(synk): for very wide layers (dim_hidden * dim_out too big to keep the
    # weight resident in VMEM), add a K grid axis ("arbitrary", last) with an
    # f32 accumulator scratch + pl.when init/finalize.
    # TODO(synk): biggest remaining win is structural — fuse consecutive SIREN
    # layers (matmul + sine) in one kernel keeping the (tile_n, width)
    # activation resident in VMEM across layers.
    out = pl.pallas_call(
        _linear_kernel,
        out_shape=jax.ShapeDtypeStruct((N, dim_out_eff), x.dtype),
        grid_spec=pltpu.PrefetchScalarGridSpec(
            num_scalar_prefetch=0,
            grid=grid,
            in_specs=[
                pl.BlockSpec((tile_n, K), lambda i: (i, 0)),
                _resident_spec((K, dim_out_eff)),
                _resident_spec((1, dim_out_eff)),
            ],
            out_specs=pl.BlockSpec((tile_n, dim_out_eff), lambda i: (i, 0)),
        ),
        compiler_params=pltpu.CompilerParams(
            dimension_semantics=("parallel",),
            vmem_limit_bytes=vmem_limit,
        ),
    )(x, wt, b2)

    if dim_out_eff != dim_out:
        out = out[:, :dim_out]
    return out


def init_linr_layer_params(key, dim_hidden, dim_out, hidden_w0):
    """Matches Linr_Layer.__init__: W ~ U(-std, std), std = sqrt(6/dim_hidden)/hidden_w0;
    bias uses nn.Linear's default U(-1/sqrt(fan_in), 1/sqrt(fan_in)).

    Returns the weight PRE-TRANSPOSED to [dim_hidden, dim_out] (the transpose
    happens exactly once, here, so forward never pays a per-call HBM transpose).
    """
    k_w, k_b = jax.random.split(key)
    std = float(np.sqrt(6.0 / dim_hidden) / hidden_w0)
    weight = jax.random.uniform(
        k_w, (dim_out, dim_hidden), dtype=jnp.float32, minval=-std, maxval=std
    )
    bound = 1.0 / float(np.sqrt(dim_hidden))
    bias = jax.random.uniform(
        k_b, (dim_out,), dtype=jnp.float32, minval=-bound, maxval=bound
    )
    return weight.T, bias   # [dim_hidden, dim_out], [dim_out]


if __name__ == "__main__":
    key = jax.random.PRNGKey(0)
    k_x, k_p, k_p2 = jax.random.split(key, 3)

    # Small but non-trivial shapes consistent with the module: a batch of
    # feature vectors.  N=1000 is deliberately ragged; dim_out=16 exercises the
    # unpadded-narrow-output path (no 128-lane padding, no post-slice).
    N = 1000
    dim_hidden = 32
    dim_out = 16
    hidden_w0 = 30.0

    x = jax.random.normal(k_x, (N, dim_hidden), dtype=jnp.float32)
    wt, bias = init_linr_layer_params(k_p, dim_hidden, dim_out, hidden_w0)
    y_ref = x @ wt + bias

    # 1) Default (auto) tile: single ragged block.
    y = jax.block_until_ready(linr_layer_forward(x, wt, bias))
    assert y.shape == (N, dim_out)
    np.testing.assert_allclose(np.asarray(y), np.asarray(y_ref), rtol=1e-5, atol=1e-5)

    # 2) Multi-step grid with a ragged LAST block (N % tile_n != 0) — verifies
    #    that Pallas masks out-of-range rows correctly without pre-padding x.
    y2 = jax.block_until_ready(linr_layer_forward(x, wt, bias, tile_n=256))
    np.testing.assert_allclose(np.asarray(y2), np.asarray(y_ref), rtol=1e-5, atol=1e-5)

    # 3) dim_out >= 64 and not a multiple of 128 — exercises the lane-padded
    #    output path (pad + final column slice).
    wt2, bias2 = init_linr_layer_params(k_p2, dim_hidden, 96, hidden_w0)
    y3 = jax.block_until_ready(linr_layer_forward(x, wt2, bias2))
    np.testing.assert_allclose(np.asarray(y3), np.asarray(x @ wt2 + bias2),
                               rtol=1e-5, atol=1e-5)

    print("KERNEL_OK")
</pallas_src>

<mosaic_0001>
module attributes {stable_mosaic.version = 11 : i64} {
  func.func @_linear_kernel(%arg0: i32, %arg1: memref<1000x32xf32, #tpu.memory_space<vmem>>, %arg2: memref<32x16xf32, #tpu.memory_space<vmem>>, %arg3: memref<1x16xf32, #tpu.memory_space<vmem>>, %arg4: memref<1000x16xf32, #tpu.memory_space<vmem>>) attributes {dimension_semantics = [#tpu.dimension_semantics<parallel>], iteration_bounds = array<i64: 1>, scalar_prefetch = 0 : i64, scratch_operands = 0 : i64, tpu.core_type = #tpu.core_type<tc>, window_params = [{transform_indices = @transform_0, window_bounds = array<i64: 1000, 32>}, {pipeline_mode = #tpu.pipeline_mode<synchronous>, transform_indices = @transform_1, window_bounds = array<i64: 32, 16>}, {pipeline_mode = #tpu.pipeline_mode<synchronous>, transform_indices = @transform_2, window_bounds = array<i64: 1, 16>}, {transform_indices = @transform_3, window_bounds = array<i64: 1000, 16>}]} {
    %c0 = arith.constant 0 : index
    %c0_0 = arith.constant 0 : index
    %0 = vector.load %arg1[%c0, %c0_0] : memref<1000x32xf32, #tpu.memory_space<vmem>>, vector<1000x32xf32>
    %c0_1 = arith.constant 0 : index
    %c0_2 = arith.constant 0 : index
    %1 = vector.load %arg2[%c0_1, %c0_2] : memref<32x16xf32, #tpu.memory_space<vmem>>, vector<32x16xf32>
    %cst = arith.constant dense<0.000000e+00> : vector<1000x16xf32>
    %2 = tpu.matmul %0, %1, %cst {dimension_numbers = #tpu.dot_dimension_numbers<[1], [0], [0], [1], [0, 0, 1, 1], [], []>} : vector<1000x32xf32>, vector<32x16xf32>, vector<1000x16xf32> -> vector<1000x16xf32>
    %c0_3 = arith.constant 0 : index
    %c0_4 = arith.constant 0 : index
    %3 = vector.load %arg3[%c0_3, %c0_4] : memref<1x16xf32, #tpu.memory_space<vmem>>, vector<1x16xf32>
    %4 = vector.broadcast %3 : vector<1x16xf32> to vector<1000x16xf32>
    %5 = arith.addf %2, %4 : vector<1000x16xf32>
    %c0_5 = arith.constant 0 : index
    %c0_6 = arith.constant 0 : index
    %6 = vector.load %arg4[%c0_5, %c0_6] : memref<1000x16xf32, #tpu.memory_space<vmem>>, vector<1000x16xf32>
    tpu.vector_store %arg4[%c0_5, %c0_6], %5 {strides = array<i32>} : memref<1000x16xf32, #tpu.memory_space<vmem>>, vector<1000x16xf32>,
    return
  }
  func.func @transform_0(%arg0: i32) -> (i32, i32) {
    %c0_i32 = arith.constant 0 : i32
    %c0_i32_0 = arith.constant 0 : i32
    return %arg0, %c0_i32 : i32, i32
  }
  func.func @transform_1(%arg0: i32) -> (i32, i32) {
    %c0_i32 = arith.constant 0 : i32
    %c0_i32_0 = arith.constant 0 : i32
    %c0_i32_1 = arith.constant 0 : i32
    return %c0_i32, %c0_i32_0 : i32, i32
  }
  func.func @transform_2(%arg0: i32) -> (i32, i32) {
    %c0_i32 = arith.constant 0 : i32
    %c0_i32_0 = arith.constant 0 : i32
    %c0_i32_1 = arith.constant 0 : i32
    return %c0_i32, %c0_i32_0 : i32, i32
  }
  func.func @transform_3(%arg0: i32) -> (i32, i32) {
    %c0_i32 = arith.constant 0 : i32
    %c0_i32_0 = arith.constant 0 : i32
    return %arg0, %c0_i32 : i32, i32
  }
}

</mosaic_0001>

<llo_original>
// kernel: tpu_custom_call.1
$region0: #{tpu_custom_call.1}
  #allocation0 [shape = 'u32[]', space=smem, size = 0x4, offset = 0x4, fixed_abs, tag = 'smem constant byte address 0x4 - core index']
  #allocation1 [shape = 'u32[72,128]{1,0:T(1,128)}', space=vmem, size = 0x9000, scoped, tag = 'internal scratch']
  %s0 = inlined_call_operand.vmem [shape: f32[1000,32], index: 0, kind: input, shape index: {}]
  %s1 = inlined_call_operand.vmem [shape: f32[32,16], index: 1, kind: input, shape index: {}]
  %s2 = inlined_call_operand.vmem [shape: f32[1,16], index: 2, kind: input, shape index: {}]
  %s3 = inlined_call_operand.vmem [shape: f32[1000,16], index: 3, kind: output, shape index: {}]
  %s4 = sld [smem:[#allocation0]]
  $region22: #{tpu_custom_call.1} parent=0
    _
  %s6 = ssub.s32 1, %s4
  %s7 = scalar_select 0, %s6, %s4
  // Predicated region
  $region2: #{tpu_custom_call.1} parent=0 // pred_check
    _
  $region3: #{tpu_custom_call.1} parent=0 // pred_check_branch
    %9 = sbr.rel (0) target = $region5
  $region4: #{tpu_custom_call.1} parent=0 // pred_region
    _
  $region5: #{tpu_custom_call.1} parent=0 // pred_fallthru
    _
  // Predicated region
  $region6: #{tpu_custom_call.1} parent=0 // pred_check
    _
  $region7: #{tpu_custom_call.1} parent=0 // pred_check_branch
    %11 = sbr.rel (0) target = $region9
  $region8: #{tpu_custom_call.1} parent=0 // pred_region
    _
  $region9: #{tpu_custom_call.1} parent=0 // pred_fallthru
    _
  // Predicated region
  $region10: #{tpu_custom_call.1} parent=0 // pred_check
    _
  $region11: #{tpu_custom_call.1} parent=0 // pred_check_branch
    %13 = sbr.rel (0) target = $region13
  $region12: #{tpu_custom_call.1} parent=0 // pred_region
    _
  $region13: #{tpu_custom_call.1} parent=0 // pred_fallthru
    _
  %v14 = vld [vmem:[%s0] sm:$0xff]
  %v15 = vld [vmem:[%s0 + $0x8] sm:$0xff]
  %v16 = vld [vmem:[%s0 + $0x10] sm:$0xff]
  %v17 = vld [vmem:[%s0 + $0x18] sm:$0xff]
  %v18 = vld [vmem:[%s0 + $0x20] sm:$0xff]
  %v19 = vld [vmem:[%s0 + $0x28] sm:$0xff]
  %v20 = vld [vmem:[%s0 + $0x30] sm:$0xff]
  %v21 = vld [vmem:[%s0 + $0x38] sm:$0xff]
  %v22 = vld [vmem:[%s0 + $0x40] sm:$0xff]
  %v23 = vld [vmem:[%s0 + $0x48] sm:$0xff]
  %v24 = vld [vmem:[%s0 + $0x50] sm:$0xff]
  %v25 = vld [vmem:[%s0 + $0x58] sm:$0xff]
  %v26 = vld [vmem:[%s0 + $0x60] sm:$0xff]
  %v27 = vld [vmem:[%s0 + $0x68] sm:$0xff]
  %v28 = vld [vmem:[%s0 + $0x70] sm:$0xff]
  %v29 = vld [vmem:[%s0 + $0x78] sm:$0xff]
  %v30 = vld [vmem:[%s0 + $0x80] sm:$0xff]
  %v31 = vld [vmem:[%s0 + $0x88] sm:$0xff]
  %v32 = vld [vmem:[%s0 + $0x90] sm:$0xff]
  %v33 = vld [vmem:[%s0 + $0x98] sm:$0xff]
  %v34 = vld [vmem:[%s0 + $0xa0] sm:$0xff]
  %v35 = vld [vmem:[%s0 + $0xa8] sm:$0xff]
  %v36 = vld [vmem:[%s0 + $0xb0] sm:$0xff]
  %v37 = vld [vmem:[%s0 + $0xb8] sm:$0xff]
  %v38 = vld [vmem:[%s0 + $0xc0] sm:$0xff]
  %v39 = vld [vmem:[%s0 + $0xc8] sm:$0xff]
  %v40 = vld [vmem:[%s0 + $0xd0] sm:$0xff]
  %v41 = vld [vmem:[%s0 + $0xd8] sm:$0xff]
  %v42 = vld [vmem:[%s0 + $0xe0] sm:$0xff]
  %v43 = vld [vmem:[%s0 + $0xe8] sm:$0xff]
  %v44 = vld [vmem:[%s0 + $0xf0] sm:$0xff]
  %v45 = vld [vmem:[%s0 + $0xf8] sm:$0xff]
  %v46 = vld [vmem:[%s0 + $0x100] sm:$0xff]
  %v47 = vld [vmem:[%s0 + $0x108] sm:$0xff]
  %v48 = vld [vmem:[%s0 + $0x110] sm:$0xff]
  %v49 = vld [vmem:[%s0 + $0x118] sm:$0xff]
  %v50 = vld [vmem:[%s0 + $0x120] sm:$0xff]
  %v51 = vld [vmem:[%s0 + $0x128] sm:$0xff]
  %v52 = vld [vmem:[%s0 + $0x130] sm:$0xff]
  %v53 = vld [vmem:[%s0 + $0x138] sm:$0xff]
  %v54 = vld [vmem:[%s0 + $0x140] sm:$0xff]
  %v55 = vld [vmem:[%s0 + $0x148] sm:$0xff]
  %v56 = vld [vmem:[%s0 + $0x150] sm:$0xff]
  %v57 = vld [vmem:[%s0 + $0x158] sm:$0xff]
  %v58 = vld [vmem:[%s0 + $0x160] sm:$0xff]
  %v59 = vld [vmem:[%s0 + $0x168] sm:$0xff]
  %v60 = vld [vmem:[%s0 + $0x170] sm:$0xff]
  %v61 = vld [vmem:[%s0 + $0x178] sm:$0xff]
  %v62 = vld [vmem:[%s0 + $0x180] sm:$0xff]
  %v63 = vld [vmem:[%s0 + $0x188] sm:$0xff]
  %v64 = vld [vmem:[%s0 + $0x190] sm:$0xff]
  %v65 = vld [vmem:[%s0 + $0x198] sm:$0xff]
  %v66 = vld [vmem:[%s0 + $0x1a0] sm:$0xff]
  %v67 = vld [vmem:[%s0 + $0x1a8] sm:$0xff]
  %v68 = vld [vmem:[%s0 + $0x1b0] sm:$0xff]
  %v69 = vld [vmem:[%s0 + $0x1b8] sm:$0xff]
  %v70 = vld [vmem:[%s0 + $0x1c0] sm:$0xff]
  %v71 = vld [vmem:[%s0 + $0x1c8] sm:$0xff]
  %v72 = vld [vmem:[%s0 + $0x1d0] sm:$0xff]
  %v73 = vld [vmem:[%s0 + $0x1d8] sm:$0xff]
  %v74 = vld [vmem:[%s0 + $0x1e0] sm:$0xff]
  %v75 = vld [vmem:[%s0 + $0x1e8] sm:$0xff]
  %v76 = vld [vmem:[%s0 + $0x1f0] sm:$0xff]
  %v77 = vld [vmem:[%s0 + $0x1f8] sm:$0xff]
  %v78 = vld [vmem:[%s0 + $0x200] sm:$0xff]
  %v79 = vld [vmem:[%s0 + $0x208] sm:$0xff]
  %v80 = vld [vmem:[%s0 + $0x210] sm:$0xff]
  %v81 = vld [vmem:[%s0 + $0x218] sm:$0xff]
  %v82 = vld [vmem:[%s0 + $0x220] sm:$0xff]
  %v83 = vld [vmem:[%s0 + $0x228] sm:$0xff]
  %v84 = vld [vmem:[%s0 + $0x230] sm:$0xff]
  %v85 = vld [vmem:[%s0 + $0x238] sm:$0xff]
  %v86 = vld [vmem:[%s0 + $0x240] sm:$0xff]
  %v87 = vld [vmem:[%s0 + $0x248] sm:$0xff]
  %v88 = vld [vmem:[%s0 + $0x250] sm:$0xff]
  %v89 = vld [vmem:[%s0 + $0x258] sm:$0xff]
  %v90 = vld [vmem:[%s0 + $0x260] sm:$0xff]
  %v91 = vld [vmem:[%s0 + $0x268] sm:$0xff]
  %v92 = vld [vmem:[%s0 + $0x270] sm:$0xff]
  %v93 = vld [vmem:[%s0 + $0x278] sm:$0xff]
  %v94 = vld [vmem:[%s0 + $0x280] sm:$0xff]
  %v95 = vld [vmem:[%s0 + $0x288] sm:$0xff]
  %v96 = vld [vmem:[%s0 + $0x290] sm:$0xff]
  %v97 = vld [vmem:[%s0 + $0x298] sm:$0xff]
  %v98 = vld [vmem:[%s0 + $0x2a0] sm:$0xff]
  %v99 = vld [vmem:[%s0 + $0x2a8] sm:$0xff]
  %v100 = vld [vmem:[%s0 + $0x2b0] sm:$0xff]
  %v101 = vld [vmem:[%s0 + $0x2b8] sm:$0xff]
  %v102 = vld [vmem:[%s0 + $0x2c0] sm:$0xff]
  %v103 = vld [vmem:[%s0 + $0x2c8] sm:$0xff]
  %v104 = vld [vmem:[%s0 + $0x2d0] sm:$0xff]
  %v105 = vld [vmem:[%s0 + $0x2d8] sm:$0xff]
  %v106 = vld [vmem:[%s0 + $0x2e0] sm:$0xff]
  %v107 = vld [vmem:[%s0 + $0x2e8] sm:$0xff]
  %v108 = vld [vmem:[%s0 + $0x2f0] sm:$0xff]
  %v109 = vld [vmem:[%s0 + $0x2f8] sm:$0xff]
  %v110 = vld [vmem:[%s0 + $0x300] sm:$0xff]
  %v111 = vld [vmem:[%s0 + $0x308] sm:$0xff]
  %v112 = vld [vmem:[%s0 + $0x310] sm:$0xff]
  %v113 = vld [vmem:[%s0 + $0x318] sm:$0xff]
  %v114 = vld [vmem:[%s0 + $0x320] sm:$0xff]
  %v115 = vld [vmem:[%s0 + $0x328] sm:$0xff]
  %v116 = vld [vmem:[%s0 + $0x330] sm:$0xff]
  %v117 = vld [vmem:[%s0 + $0x338] sm:$0xff]
  %v118 = vld [vmem:[%s0 + $0x340] sm:$0xff]
  %v119 = vld [vmem:[%s0 + $0x348] sm:$0xff]
  %v120 = vld [vmem:[%s0 + $0x350] sm:$0xff]
  %v121 = vld [vmem:[%s0 + $0x358] sm:$0xff]
  %v122 = vld [vmem:[%s0 + $0x360] sm:$0xff]
  %v123 = vld [vmem:[%s0 + $0x368] sm:$0xff]
  %v124 = vld [vmem:[%s0 + $0x370] sm:$0xff]
  %v125 = vld [vmem:[%s0 + $0x378] sm:$0xff]
  %v126 = vld [vmem:[%s0 + $0x380] sm:$0xff]
  %v127 = vld [vmem:[%s0 + $0x388] sm:$0xff]
  %v128 = vld [vmem:[%s0 + $0x390] sm:$0xff]
  %v129 = vld [vmem:[%s0 + $0x398] sm:$0xff]
  %v130 = vld [vmem:[%s0 + $0x3a0] sm:$0xff]
  %v131 = vld [vmem:[%s0 + $0x3a8] sm:$0xff]
  %v132 = vld [vmem:[%s0 + $0x3b0] sm:$0xff]
  %v133 = vld [vmem:[%s0 + $0x3b8] sm:$0xff]
  %v134 = vld [vmem:[%s0 + $0x3c0] sm:$0xff]
  %v135 = vld [vmem:[%s0 + $0x3c8] sm:$0xff]
  %v136 = vld [vmem:[%s0 + $0x3d0] sm:$0xff]
  %v137 = vld [vmem:[%s0 + $0x3d8] sm:$0xff]
  %v138 = vld [vmem:[%s0 + $0x3e0] sm:$0xff]
  %v139 = vld [vmem:[%s1] sm:$0xff]
  %v140 = vld [vmem:[%s1 + $0x8] sm:$0xff]
  %v141 = vld [vmem:[%s1 + $0x10] sm:$0xff]
  %v142 = vld [vmem:[%s1 + $0x18] sm:$0xff]
  %v143 = vld [vmem:[%s2] sm:$0x1]
  %v145 = vperm.slane %v143, 0
  %vm147 = vcmask 261120
  %v149 = vsel %vm147, %v14, 0
  %v152 = vsel %vm147, %v15, 0
  %v155 = vsel %vm147, %v16, 0
  %v158 = vsel %vm147, %v17, 0
  %v161 = vsel %vm147, %v18, 0
  %v164 = vsel %vm147, %v19, 0
  %v167 = vsel %vm147, %v20, 0
  %v170 = vsel %vm147, %v21, 0
  %v173 = vsel %vm147, %v22, 0
  %v176 = vsel %vm147, %v23, 0
  %v179 = vsel %vm147, %v24, 0
  %v182 = vsel %vm147, %v25, 0
  %v185 = vsel %vm147, %v26, 0
  %v188 = vsel %vm147, %v27, 0
  %v191 = vsel %vm147, %v28, 0
  %v194 = vsel %vm147, %v29, 0
  %v197 = vsel %vm147, %v30, 0
  %v200 = vsel %vm147, %v31, 0
  %v203 = vsel %vm147, %v32, 0
  %v206 = vsel %vm147, %v33, 0
  %v209 = vsel %vm147, %v34, 0
  %v212 = vsel %vm147, %v35, 0
  %v215 = vsel %vm147, %v36, 0
  %v218 = vsel %vm147, %v37, 0
  %v221 = vsel %vm147, %v38, 0
  %v224 = vsel %vm147, %v39, 0
  %v227 = vsel %vm147, %v40, 0
  %v230 = vsel %vm147, %v41, 0
  %v233 = vsel %vm147, %v42, 0
  %v236 = vsel %vm147, %v43, 0
  %v239 = vsel %vm147, %v44, 0
  %v242 = vsel %vm147, %v45, 0
  %v245 = vsel %vm147, %v46, 0
  %v248 = vsel %vm147, %v47, 0
  %v251 = vsel %vm147, %v48, 0
  %v254 = vsel %vm147, %v49, 0
  %v257 = vsel %vm147, %v50, 0
  %v260 = vsel %vm147, %v51, 0
  %v263 = vsel %vm147, %v52, 0
  %v266 = vsel %vm147, %v53, 0
  %v269 = vsel %vm147, %v54, 0
  %v272 = vsel %vm147, %v55, 0
  %v275 = vsel %vm147, %v56, 0
  %v278 = vsel %vm147, %v57, 0
  %v281 = vsel %vm147, %v58, 0
  %v284 = vsel %vm147, %v59, 0
  %v287 = vsel %vm147, %v60, 0
  %v290 = vsel %vm147, %v61, 0
  %v293 = vsel %vm147, %v62, 0
  %v296 = vsel %vm147, %v63, 0
  %v299 = vsel %vm147, %v64, 0
  %v302 = vsel %vm147, %v65, 0
  %v305 = vsel %vm147, %v66, 0
  %v308 = vsel %vm147, %v67, 0
  %v311 = vsel %vm147, %v68, 0
  %v314 = vsel %vm147, %v69, 0
  %v317 = vsel %vm147, %v70, 0
  %v320 = vsel %vm147, %v71, 0
  %v323 = vsel %vm147, %v72, 0
  %v326 = vsel %vm147, %v73, 0
  %v329 = vsel %vm147, %v74, 0
  %v332 = vsel %vm147, %v75, 0
  %v335 = vsel %vm147, %v76, 0
  %v338 = vsel %vm147, %v77, 0
  %v341 = vsel %vm147, %v78, 0
  %v344 = vsel %vm147, %v79, 0
  %v347 = vsel %vm147, %v80, 0
  %v350 = vsel %vm147, %v81, 0
  %v353 = vsel %vm147, %v82, 0
  %v356 = vsel %vm147, %v83, 0
  %v359 = vsel %vm147, %v84, 0
  %v362 = vsel %vm147, %v85, 0
  %v365 = vsel %vm147, %v86, 0
  %v368 = vsel %vm147, %v87, 0
  %v371 = vsel %vm147, %v88, 0
  %v374 = vsel %vm147, %v89, 0
  %v377 = vsel %vm147, %v90, 0
  %v380 = vsel %vm147, %v91, 0
  %v383 = vsel %vm147, %v92, 0
  %v386 = vsel %vm147, %v93, 0
  %v389 = vsel %vm147, %v94, 0
  %v392 = vsel %vm147, %v95, 0
  %v395 = vsel %vm147, %v96, 0
  %v398 = vsel %vm147, %v97, 0
  %v401 = vsel %vm147, %v98, 0
  %v404 = vsel %vm147, %v99, 0
  %v407 = vsel %vm147, %v100, 0
  %v410 = vsel %vm147, %v101, 0
  %v413 = vsel %vm147, %v102, 0
  %v416 = vsel %vm147, %v103, 0
  %v419 = vsel %vm147, %v104, 0
  %v422 = vsel %vm147, %v105, 0
  %v425 = vsel %vm147, %v106, 0
  %v428 = vsel %vm147, %v107, 0
  %v431 = vsel %vm147, %v108, 0
  %v434 = vsel %vm147, %v109, 0
  %v437 = vsel %vm147, %v110, 0
  %v440 = vsel %vm147, %v111, 0
  %v443 = vsel %vm147, %v112, 0
  %v446 = vsel %vm147, %v113, 0
  %v449 = vsel %vm147, %v114, 0
  %v452 = vsel %vm147, %v115, 0
  %v455 = vsel %vm147, %v116, 0
  %v458 = vsel %vm147, %v117, 0
  %v461 = vsel %vm147, %v118, 0
  %v464 = vsel %vm147, %v119, 0
  %v467 = vsel %vm147, %v120, 0
  %v470 = vsel %vm147, %v121, 0
  %v473 = vsel %vm147, %v122, 0
  %v476 = vsel %vm147, %v123, 0
  %v479 = vsel %vm147, %v124, 0
  %v482 = vsel %vm147, %v125, 0
  %v485 = vsel %vm147, %v126, 0
  %v488 = vsel %vm147, %v127, 0
  %v491 = vsel %vm147, %v128, 0
  %v494 = vsel %vm147, %v129, 0
  %v497 = vsel %vm147, %v130, 0
  %v500 = vsel %vm147, %v131, 0
  %v503 = vsel %vm147, %v132, 0
  %v506 = vsel %vm147, %v133, 0
  %v509 = vsel %vm147, %v134, 0
  %v512 = vsel %vm147, %v135, 0
  %v515 = vsel %vm147, %v136, 0
  %v518 = vsel %vm147, %v137, 0
  %v521 = vsel %vm147, %v138, 0
  %523 = vmatpush.msra.mxu0 0.0
  %524 = vmatpush.msra.mxu0 0.0
  %525 = vmatpush.msra.mxu0 0.0
  %526 = vmatpush.msra.mxu0 0.0
  %527 = vmatpush.msra.mxu0 0.0
  %528 = vmatpush.msra.mxu0 0.0
  %529 = vmatpush.msra.mxu0 0.0
  %530 = vmatpush.msra.mxu0 0.0
  %531 = vmatpush.msra.mxu0 0.0
  %532 = vmatpush.msra.mxu0 0.0
  %533 = vmatpush.msra.mxu0 0.0
  %534 = vmatpush.msra.mxu0 0.0
  %535 = vmatpush.msra.mxu0 %v142
  %536 = vmatpush.msra.mxu0 %v141
  %537 = vmatpush.msra.mxu0 %v140
  %538 = vmatpush.msra.mxu0 %v139
  %539 = vmatmul.f32.gmra.mxu0 %v149
  %v540 = vpop.f32.mrf.mxu0
  %v541 = vadd.f32 %v145, %v540
  %542 = vmatmul.f32.gmra.mxu0 %v152
  %v543 = vpop.f32.mrf.mxu0
  %v544 = vadd.f32 %v145, %v543
  %545 = vmatmul.f32.gmra.mxu0 %v155
  %v546 = vpop.f32.mrf.mxu0
  %v547 = vadd.f32 %v145, %v546
  %548 = vmatmul.f32.gmra.mxu0 %v158
  %v549 = vpop.f32.mrf.mxu0
  %v550 = vadd.f32 %v145, %v549
  %551 = vmatmul.f32.gmra.mxu0 %v161
  %v552 = vpop.f32.mrf.mxu0
  %v553 = vadd.f32 %v145, %v552
  %554 = vmatmul.f32.gmra.mxu0 %v164
  %v555 = vpop.f32.mrf.mxu0
  %v556 = vadd.f32 %v145, %v555
  %557 = vmatmul.f32.gmra.mxu0 %v167
  %v558 = vpop.f32.mrf.mxu0
  %v559 = vadd.f32 %v145, %v558
  %560 = vmatmul.f32.gmra.mxu0 %v170
  %v561 = vpop.f32.mrf.mxu0
  %v562 = vadd.f32 %v145, %v561
  %563 = vmatmul.f32.gmra.mxu0 %v173
  %v564 = vpop.f32.mrf.mxu0
  %v565 = vadd.f32 %v145, %v564
  %566 = vmatmul.f32.gmra.mxu0 %v176
  %v567 = vpop.f32.mrf.mxu0
  %v568 = vadd.f32 %v145, %v567
  %569 = vmatmul.f32.gmra.mxu0 %v179
  %v570 = vpop.f32.mrf.mxu0
  %v571 = vadd.f32 %v145, %v570
  %572 = vmatmul.f32.gmra.mxu0 %v182
  %v573 = vpop.f32.mrf.mxu0
  %v574 = vadd.f32 %v145, %v573
  %575 = vmatmul.f32.gmra.mxu0 %v185
  %v576 = vpop.f32.mrf.mxu0
  %v577 = vadd.f32 %v145, %v576
  %578 = vmatmul.f32.gmra.mxu0 %v188
  %v579 = vpop.f32.mrf.mxu0
  %v580 = vadd.f32 %v145, %v579
  %581 = vmatmul.f32.gmra.mxu0 %v191
  %v582 = vpop.f32.mrf.mxu0
  %v583 = vadd.f32 %v145, %v582
  %584 = vmatmul.f32.gmra.mxu0 %v194
  %v585 = vpop.f32.mrf.mxu0
  %v586 = vadd.f32 %v145, %v585
  %587 = vmatmul.f32.gmra.mxu0 %v197
  %v588 = vpop.f32.mrf.mxu0
  %v589 = vadd.f32 %v145, %v588
  %590 = vmatmul.f32.gmra.mxu0 %v200
  %v591 = vpop.f32.mrf.mxu0
  %v592 = vadd.f32 %v145, %v591
  %593 = vmatmul.f32.gmra.mxu0 %v203
  %v594 = vpop.f32.mrf.mxu0
  %v595 = vadd.f32 %v145, %v594
  %596 = vmatmul.f32.gmra.mxu0 %v206
  %v597 = vpop.f32.mrf.mxu0
  %v598 = vadd.f32 %v145, %v597
  %599 = vmatmul.f32.gmra.mxu0 %v209
  %v600 = vpop.f32.mrf.mxu0
  %v601 = vadd.f32 %v145, %v600
  %602 = vmatmul.f32.gmra.mxu0 %v212
  %v603 = vpop.f32.mrf.mxu0
  %v604 = vadd.f32 %v145, %v603
  %605 = vmatmul.f32.gmra.mxu0 %v215
  %v606 = vpop.f32.mrf.mxu0
  %v607 = vadd.f32 %v145, %v606
  %608 = vmatmul.f32.gmra.mxu0 %v218
  %v609 = vpop.f32.mrf.mxu0
  %v610 = vadd.f32 %v145, %v609
  %611 = vmatmul.f32.gmra.mxu0 %v221
  %v612 = vpop.f32.mrf.mxu0
  %v613 = vadd.f32 %v145, %v612
  %614 = vmatmul.f32.gmra.mxu0 %v224
  %v615 = vpop.f32.mrf.mxu0
  %v616 = vadd.f32 %v145, %v615
  %617 = vmatmul.f32.gmra.mxu0 %v227
  %v618 = vpop.f32.mrf.mxu0
  %v619 = vadd.f32 %v145, %v618
  %620 = vmatmul.f32.gmra.mxu0 %v230
  %v621 = vpop.f32.mrf.mxu0
  %v622 = vadd.f32 %v145, %v621
  %623 = vmatmul.f32.gmra.mxu0 %v233
  %v624 = vpop.f32.mrf.mxu0
  %v625 = vadd.f32 %v145, %v624
  %626 = vmatmul.f32.gmra.mxu0 %v236
  %v627 = vpop.f32.mrf.mxu0
  %v628 = vadd.f32 %v145, %v627
  %629 = vmatmul.f32.gmra.mxu0 %v239
  %v630 = vpop.f32.mrf.mxu0
  %v631 = vadd.f32 %v145, %v630
  %632 = vmatmul.f32.gmra.mxu0 %v242
  %v633 = vpop.f32.mrf.mxu0
  %v634 = vadd.f32 %v145, %v633
  %635 = vmatmul.f32.gmra.mxu0 %v245
  %v636 = vpop.f32.mrf.mxu0
  %v637 = vadd.f32 %v145, %v636
  %638 = vmatmul.f32.gmra.mxu0 %v248
  %v639 = vpop.f32.mrf.mxu0
  %v640 = vadd.f32 %v145, %v639
  %641 = vmatmul.f32.gmra.mxu0 %v251
  %v642 = vpop.f32.mrf.mxu0
  %v643 = vadd.f32 %v145, %v642
  %644 = vmatmul.f32.gmra.mxu0 %v254
  %v645 = vpop.f32.mrf.mxu0
  %v646 = vadd.f32 %v145, %v645
  %647 = vmatmul.f32.gmra.mxu0 %v257
  %v648 = vpop.f32.mrf.mxu0
  %v649 = vadd.f32 %v145, %v648
  %650 = vmatmul.f32.gmra.mxu0 %v260
  %v651 = vpop.f32.mrf.mxu0
  %v652 = vadd.f32 %v145, %v651
  %653 = vmatmul.f32.gmra.mxu0 %v263
  %v654 = vpop.f32.mrf.mxu0
  %v655 = vadd.f32 %v145, %v654
  %656 = vmatmul.f32.gmra.mxu0 %v266
  %v657 = vpop.f32.mrf.mxu0
  %v658 = vadd.f32 %v145, %v657
  %659 = vmatmul.f32.gmra.mxu0 %v269
  %v660 = vpop.f32.mrf.mxu0
  %v661 = vadd.f32 %v145, %v660
  %662 = vmatmul.f32.gmra.mxu0 %v272
  %v663 = vpop.f32.mrf.mxu0
  %v664 = vadd.f32 %v145, %v663
  %665 = vmatmul.f32.gmra.mxu0 %v275
  %v666 = vpop.f32.mrf.mxu0
  %v667 = vadd.f32 %v145, %v666
  %668 = vmatmul.f32.gmra.mxu0 %v278
  %v669 = vpop.f32.mrf.mxu0
  %v670 = vadd.f32 %v145, %v669
  %671 = vmatmul.f32.gmra.mxu0 %v281
  %v672 = vpop.f32.mrf.mxu0
  %v673 = vadd.f32 %v145, %v672
  %674 = vmatmul.f32.gmra.mxu0 %v284
  %v675 = vpop.f32.mrf.mxu0
  %v676 = vadd.f32 %v145, %v675
  %677 = vmatmul.f32.gmra.mxu0 %v287
  %v678 = vpop.f32.mrf.mxu0
  %v679 = vadd.f32 %v145, %v678
  %680 = vmatmul.f32.gmra.mxu0 %v290
  %v681 = vpop.f32.mrf.mxu0
  %v682 = vadd.f32 %v145, %v681
  %683 = vmatmul.f32.gmra.mxu0 %v293
  %v684 = vpop.f32.mrf.mxu0
  %v685 = vadd.f32 %v145, %v684
  %686 = vmatmul.f32.gmra.mxu0 %v296
  %v687 = vpop.f32.mrf.mxu0
  %v688 = vadd.f32 %v145, %v687
  %689 = vmatmul.f32.gmra.mxu0 %v299
  %v690 = vpop.f32.mrf.mxu0
  %v691 = vadd.f32 %v145, %v690
  %692 = vmatmul.f32.gmra.mxu0 %v302
  %v693 = vpop.f32.mrf.mxu0
  %v694 = vadd.f32 %v145, %v693
  %695 = vmatmul.f32.gmra.mxu0 %v305
  %v696 = vpop.f32.mrf.mxu0
  %v697 = vadd.f32 %v145, %v696
  %698 = vmatmul.f32.gmra.mxu0 %v308
  %v699 = vpop.f32.mrf.mxu0
  %v700 = vadd.f32 %v145, %v699
  %701 = vmatmul.f32.gmra.mxu0 %v311
  %v702 = vpop.f32.mrf.mxu0
  %v703 = vadd.f32 %v145, %v702
  %704 = vmatmul.f32.gmra.mxu0 %v314
  %v705 = vpop.f32.mrf.mxu0
  %v706 = vadd.f32 %v145, %v705
  %707 = vmatmul.f32.gmra.mxu0 %v317
  %v708 = vpop.f32.mrf.mxu0
  %v709 = vadd.f32 %v145, %v708
  %710 = vmatmul.f32.gmra.mxu0 %v320
  %v711 = vpop.f32.mrf.mxu0
  %v712 = vadd.f32 %v145, %v711
  %713 = vmatmul.f32.gmra.mxu0 %v323
  %v714 = vpop.f32.mrf.mxu0
  %v715 = vadd.f32 %v145, %v714
  %716 = vmatmul.f32.gmra.mxu0 %v326
  %v717 = vpop.f32.mrf.mxu0
  %v718 = vadd.f32 %v145, %v717
  %719 = vmatmul.f32.gmra.mxu0 %v329
  %v720 = vpop.f32.mrf.mxu0
  %v721 = vadd.f32 %v145, %v720
  %722 = vmatmul.f32.gmra.mxu0 %v332
  %v723 = vpop.f32.mrf.mxu0
  %v724 = vadd.f32 %v145, %v723
  %725 = vmatmul.f32.gmra.mxu0 %v335
  %v726 = vpop.f32.mrf.mxu0
  %v727 = vadd.f32 %v145, %v726
  %728 = vmatmul.f32.gmra.mxu0 %v338
  %v729 = vpop.f32.mrf.mxu0
  %v730 = vadd.f32 %v145, %v729
  %731 = vmatmul.f32.gmra.mxu0 %v341
  %v732 = vpop.f32.mrf.mxu0
  %v733 = vadd.f32 %v145, %v732
  %734 = vmatmul.f32.gmra.mxu0 %v344
  %v735 = vpop.f32.mrf.mxu0
  %v736 = vadd.f32 %v145, %v735
  %737 = vmatmul.f32.gmra.mxu0 %v347
  %v738 = vpop.f32.mrf.mxu0
  %v739 = vadd.f32 %v145, %v738
  %740 = vmatmul.f32.gmra.mxu0 %v350
  %v741 = vpop.f32.mrf.mxu0
  %v742 = vadd.f32 %v145, %v741
  %743 = vmatmul.f32.gmra.mxu0 %v353
  %v744 = vpop.f32.mrf.mxu0
  %v745 = vadd.f32 %v145, %v744
  %746 = vmatmul.f32.gmra.mxu0 %v356
  %v747 = vpop.f32.mrf.mxu0
  %v748 = vadd.f32 %v145, %v747
  %749 = vmatmul.f32.gmra.mxu0 %v359
  %v750 = vpop.f32.mrf.mxu0
  %v751 = vadd.f32 %v145, %v750
  %752 = vmatmul.f32.gmra.mxu0 %v362
  %v753 = vpop.f32.mrf.mxu0
  %v754 = vadd.f32 %v145, %v753
  %755 = vmatmul.f32.gmra.mxu0 %v365
  %v756 = vpop.f32.mrf.mxu0
  %v757 = vadd.f32 %v145, %v756
  %758 = vmatmul.f32.gmra.mxu0 %v368
  %v759 = vpop.f32.mrf.mxu0
  %v760 = vadd.f32 %v145, %v759
  %761 = vmatmul.f32.gmra.mxu0 %v371
  %v762 = vpop.f32.mrf.mxu0
  %v763 = vadd.f32 %v145, %v762
  %764 = vmatmul.f32.gmra.mxu0 %v374
  %v765 = vpop.f32.mrf.mxu0
  %v766 = vadd.f32 %v145, %v765
  %767 = vmatmul.f32.gmra.mxu0 %v377
  %v768 = vpop.f32.mrf.mxu0
  %v769 = vadd.f32 %v145, %v768
  %770 = vmatmul.f32.gmra.mxu0 %v380
  %v771 = vpop.f32.mrf.mxu0
  %v772 = vadd.f32 %v145, %v771
  %773 = vmatmul.f32.gmra.mxu0 %v383
  %v774 = vpop.f32.mrf.mxu0
  %v775 = vadd.f32 %v145, %v774
  %776 = vmatmul.f32.gmra.mxu0 %v386
  %v777 = vpop.f32.mrf.mxu0
  %v778 = vadd.f32 %v145, %v777
  %779 = vmatmul.f32.gmra.mxu0 %v389
  %v780 = vpop.f32.mrf.mxu0
  %v781 = vadd.f32 %v145, %v780
  %782 = vmatmul.f32.gmra.mxu0 %v392
  %v783 = vpop.f32.mrf.mxu0
  %v784 = vadd.f32 %v145, %v783
  %785 = vmatmul.f32.gmra.mxu0 %v395
  %v786 = vpop.f32.mrf.mxu0
  %v787 = vadd.f32 %v145, %v786
  %788 = vmatmul.f32.gmra.mxu0 %v398
  %v789 = vpop.f32.mrf.mxu0
  %v790 = vadd.f32 %v145, %v789
  %791 = vmatmul.f32.gmra.mxu0 %v401
  %v792 = vpop.f32.mrf.mxu0
  %v793 = vadd.f32 %v145, %v792
  %794 = vmatmul.f32.gmra.mxu0 %v404
  %v795 = vpop.f32.mrf.mxu0
  %v796 = vadd.f32 %v145, %v795
  %797 = vmatmul.f32.gmra.mxu0 %v407
  %v798 = vpop.f32.mrf.mxu0
  %v799 = vadd.f32 %v145, %v798
  %800 = vmatmul.f32.gmra.mxu0 %v410
  %v801 = vpop.f32.mrf.mxu0
  %v802 = vadd.f32 %v145, %v801
  %803 = vmatmul.f32.gmra.mxu0 %v413
  %v804 = vpop.f32.mrf.mxu0
  %v805 = vadd.f32 %v145, %v804
  %806 = vmatmul.f32.gmra.mxu0 %v416
  %v807 = vpop.f32.mrf.mxu0
  %v808 = vadd.f32 %v145, %v807
  %809 = vmatmul.f32.gmra.mxu0 %v419
  %v810 = vpop.f32.mrf.mxu0
  %v811 = vadd.f32 %v145, %v810
  %812 = vmatmul.f32.gmra.mxu0 %v422
  %v813 = vpop.f32.mrf.mxu0
  %v814 = vadd.f32 %v145, %v813
  %815 = vmatmul.f32.gmra.mxu0 %v425
  %v816 = vpop.f32.mrf.mxu0
  %v817 = vadd.f32 %v145, %v816
  %818 = vmatmul.f32.gmra.mxu0 %v428
  %v819 = vpop.f32.mrf.mxu0
  %v820 = vadd.f32 %v145, %v819
  %821 = vmatmul.f32.gmra.mxu0 %v431
  %v822 = vpop.f32.mrf.mxu0
  %v823 = vadd.f32 %v145, %v822
  %824 = vmatmul.f32.gmra.mxu0 %v434
  %v825 = vpop.f32.mrf.mxu0
  %v826 = vadd.f32 %v145, %v825
  %827 = vmatmul.f32.gmra.mxu0 %v437
  %v828 = vpop.f32.mrf.mxu0
  %v829 = vadd.f32 %v145, %v828
  %830 = vmatmul.f32.gmra.mxu0 %v440
  %v831 = vpop.f32.mrf.mxu0
  %v832 = vadd.f32 %v145, %v831
  %833 = vmatmul.f32.gmra.mxu0 %v443
  %v834 = vpop.f32.mrf.mxu0
  %v835 = vadd.f32 %v145, %v834
  %836 = vmatmul.f32.gmra.mxu0 %v446
  %v837 = vpop.f32.mrf.mxu0
  %v838 = vadd.f32 %v145, %v837
  %839 = vmatmul.f32.gmra.mxu0 %v449
  %v840 = vpop.f32.mrf.mxu0
  %v841 = vadd.f32 %v145, %v840
  %842 = vmatmul.f32.gmra.mxu0 %v452
  %v843 = vpop.f32.mrf.mxu0
  %v844 = vadd.f32 %v145, %v843
  %845 = vmatmul.f32.gmra.mxu0 %v455
  %v846 = vpop.f32.mrf.mxu0
  %v847 = vadd.f32 %v145, %v846
  %848 = vmatmul.f32.gmra.mxu0 %v458
  %v849 = vpop.f32.mrf.mxu0
  %v850 = vadd.f32 %v145, %v849
  %851 = vmatmul.f32.gmra.mxu0 %v461
  %v852 = vpop.f32.mrf.mxu0
  %v853 = vadd.f32 %v145, %v852
  %854 = vmatmul.f32.gmra.mxu0 %v464
  %v855 = vpop.f32.mrf.mxu0
  %v856 = vadd.f32 %v145, %v855
  %857 = vmatmul.f32.gmra.mxu0 %v467
  %v858 = vpop.f32.mrf.mxu0
  %v859 = vadd.f32 %v145, %v858
  %860 = vmatmul.f32.gmra.mxu0 %v470
  %v861 = vpop.f32.mrf.mxu0
  %v862 = vadd.f32 %v145, %v861
  %863 = vmatmul.f32.gmra.mxu0 %v473
  %v864 = vpop.f32.mrf.mxu0
  %v865 = vadd.f32 %v145, %v864
  %866 = vmatmul.f32.gmra.mxu0 %v476
  %v867 = vpop.f32.mrf.mxu0
  %v868 = vadd.f32 %v145, %v867
  %869 = vmatmul.f32.gmra.mxu0 %v479
  %v870 = vpop.f32.mrf.mxu0
  %v871 = vadd.f32 %v145, %v870
  %872 = vmatmul.f32.gmra.mxu0 %v482
  %v873 = vpop.f32.mrf.mxu0
  %v874 = vadd.f32 %v145, %v873
  %875 = vmatmul.f32.gmra.mxu0 %v485
  %v876 = vpop.f32.mrf.mxu0
  %v877 = vadd.f32 %v145, %v876
  %878 = vmatmul.f32.gmra.mxu0 %v488
  %v879 = vpop.f32.mrf.mxu0
  %v880 = vadd.f32 %v145, %v879
  %881 = vmatmul.f32.gmra.mxu0 %v491
  %v882 = vpop.f32.mrf.mxu0
  %v883 = vadd.f32 %v145, %v882
  %884 = vmatmul.f32.gmra.mxu0 %v494
  %v885 = vpop.f32.mrf.mxu0
  %v886 = vadd.f32 %v145, %v885
  %887 = vmatmul.f32.gmra.mxu0 %v497
  %v888 = vpop.f32.mrf.mxu0
  %v889 = vadd.f32 %v145, %v888
  %890 = vmatmul.f32.gmra.mxu0 %v500
  %v891 = vpop.f32.mrf.mxu0
  %v892 = vadd.f32 %v145, %v891
  %893 = vmatmul.f32.gmra.mxu0 %v503
  %v894 = vpop.f32.mrf.mxu0
  %v895 = vadd.f32 %v145, %v894
  %896 = vmatmul.f32.gmra.mxu0 %v506
  %v897 = vpop.f32.mrf.mxu0
  %v898 = vadd.f32 %v145, %v897
  %899 = vmatmul.f32.gmra.mxu0 %v509
  %v900 = vpop.f32.mrf.mxu0
  %v901 = vadd.f32 %v145, %v900
  %902 = vmatmul.f32.gmra.mxu0 %v512
  %v903 = vpop.f32.mrf.mxu0
  %v904 = vadd.f32 %v145, %v903
  %905 = vmatmul.f32.gmra.mxu0 %v515
  %v906 = vpop.f32.mrf.mxu0
  %v907 = vadd.f32 %v145, %v906
  %908 = vmatmul.f32.gmra.mxu0 %v518
  %v909 = vpop.f32.mrf.mxu0
  %v910 = vadd.f32 %v145, %v909
  %911 = vmatmul.f32.gmra.mxu0 %v521
  %v912 = vpop.f32.mrf.mxu0
  %v913 = vadd.f32 %v145, %v912
  %914 = vdwg.mxu0
  %vm915 = vcmask 130048
  %916 = vst.msk [vmem:[%s3] sm:$0xff] %vm915, %v541
  %917 = vst.msk [vmem:[%s3 + $0x8] sm:$0xff] %vm915, %v544
  %918 = vst.msk [vmem:[%s3 + $0x10] sm:$0xff] %vm915, %v547
  %919 = vst.msk [vmem:[%s3 + $0x18] sm:$0xff] %vm915, %v550
  %920 = vst.msk [vmem:[%s3 + $0x20] sm:$0xff] %vm915, %v553
  %921 = vst.msk [vmem:[%s3 + $0x28] sm:$0xff] %vm915, %v556
  %922 = vst.msk [vmem:[%s3 + $0x30] sm:$0xff] %vm915, %v559
  %923 = vst.msk [vmem:[%s3 + $0x38] sm:$0xff] %vm915, %v562
  %924 = vst.msk [vmem:[%s3 + $0x40] sm:$0xff] %vm915, %v565
  %925 = vst.msk [vmem:[%s3 + $0x48] sm:$0xff] %vm915, %v568
  %926 = vst.msk [vmem:[%s3 + $0x50] sm:$0xff] %vm915, %v571
  %927 = vst.msk [vmem:[%s3 + $0x58] sm:$0xff] %vm915, %v574
  %928 = vst.msk [vmem:[%s3 + $0x60] sm:$0xff] %vm915, %v577
  %929 = vst.msk [vmem:[%s3 + $0x68] sm:$0xff] %vm915, %v580
  %930 = vst.msk [vmem:[%s3 + $0x70] sm:$0xff] %vm915, %v583
  %931 = vst.msk [vmem:[%s3 + $0x78] sm:$0xff] %vm915, %v586
  %932 = vst.msk [vmem:[%s3 + $0x80] sm:$0xff] %vm915, %v589
  %933 = vst.msk [vmem:[%s3 + $0x88] sm:$0xff] %vm915, %v592
  %934 = vst.msk [vmem:[%s3 + $0x90] sm:$0xff] %vm915, %v595
  %935 = vst.msk [vmem:[%s3 + $0x98] sm:$0xff] %vm915, %v598
  %936 = vst.msk [vmem:[%s3 + $0xa0] sm:$0xff] %vm915, %v601
  %937 = vst.msk [vmem:[%s3 + $0xa8] sm:$0xff] %vm915, %v604
  %938 = vst.msk [vmem:[%s3 + $0xb0] sm:$0xff] %vm915, %v607
  %939 = vst.msk [vmem:[%s3 + $0xb8] sm:$0xff] %vm915, %v610
  %940 = vst.msk [vmem:[%s3 + $0xc0] sm:$0xff] %vm915, %v613
  %941 = vst.msk [vmem:[%s3 + $0xc8] sm:$0xff] %vm915, %v616
  %942 = vst.msk [vmem:[%s3 + $0xd0] sm:$0xff] %vm915, %v619
  %943 = vst.msk [vmem:[%s3 + $0xd8] sm:$0xff] %vm915, %v622
  %944 = vst.msk [vmem:[%s3 + $0xe0] sm:$0xff] %vm915, %v625
  %945 = vst.msk [vmem:[%s3 + $0xe8] sm:$0xff] %vm915, %v628
  %946 = vst.msk [vmem:[%s3 + $0xf0] sm:$0xff] %vm915, %v631
  %947 = vst.msk [vmem:[%s3 + $0xf8] sm:$0xff] %vm915, %v634
  %948 = vst.msk [vmem:[%s3 + $0x100] sm:$0xff] %vm915, %v637
  %949 = vst.msk [vmem:[%s3 + $0x108] sm:$0xff] %vm915, %v640
  %950 = vst.msk [vmem:[%s3 + $0x110] sm:$0xff] %vm915, %v643
  %951 = vst.msk [vmem:[%s3 + $0x118] sm:$0xff] %vm915, %v646
  %952 = vst.msk [vmem:[%s3 + $0x120] sm:$0xff] %vm915, %v649
  %953 = vst.msk [vmem:[%s3 + $0x128] sm:$0xff] %vm915, %v652
  %954 = vst.msk [vmem:[%s3 + $0x130] sm:$0xff] %vm915, %v655
  %955 = vst.msk [vmem:[%s3 + $0x138] sm:$0xff] %vm915, %v658
  %956 = vst.msk [vmem:[%s3 + $0x140] sm:$0xff] %vm915, %v661
  %957 = vst.msk [vmem:[%s3 + $0x148] sm:$0xff] %vm915, %v664
  %958 = vst.msk [vmem:[%s3 + $0x150] sm:$0xff] %vm915, %v667
  %959 = vst.msk [vmem:[%s3 + $0x158] sm:$0xff] %vm915, %v670
  %960 = vst.msk [vmem:[%s3 + $0x160] sm:$0xff] %vm915, %v673
  %961 = vst.msk [vmem:[%s3 + $0x168] sm:$0xff] %vm915, %v676
  %962 = vst.msk [vmem:[%s3 + $0x170] sm:$0xff] %vm915, %v679
  %963 = vst.msk [vmem:[%s3 + $0x178] sm:$0xff] %vm915, %v682
  %964 = vst.msk [vmem:[%s3 + $0x180] sm:$0xff] %vm915, %v685
  %965 = vst.msk [vmem:[%s3 + $0x188] sm:$0xff] %vm915, %v688
  %966 = vst.msk [vmem:[%s3 + $0x190] sm:$0xff] %vm915, %v691
  %967 = vst.msk [vmem:[%s3 + $0x198] sm:$0xff] %vm915, %v694
  %968 = vst.msk [vmem:[%s3 + $0x1a0] sm:$0xff] %vm915, %v697
  %969 = vst.msk [vmem:[%s3 + $0x1a8] sm:$0xff] %vm915, %v700
  %970 = vst.msk [vmem:[%s3 + $0x1b0] sm:$0xff] %vm915, %v703
  %971 = vst.msk [vmem:[%s3 + $0x1b8] sm:$0xff] %vm915, %v706
  %972 = vst.msk [vmem:[%s3 + $0x1c0] sm:$0xff] %vm915, %v709
  %973 = vst.msk [vmem:[%s3 + $0x1c8] sm:$0xff] %vm915, %v712
  %974 = vst.msk [vmem:[%s3 + $0x1d0] sm:$0xff] %vm915, %v715
  %975 = vst.msk [vmem:[%s3 + $0x1d8] sm:$0xff] %vm915, %v718
  %976 = vst.msk [vmem:[%s3 + $0x1e0] sm:$0xff] %vm915, %v721
  %977 = vst.msk [vmem:[%s3 + $0x1e8] sm:$0xff] %vm915, %v724
  %978 = vst.msk [vmem:[%s3 + $0x1f0] sm:$0xff] %vm915, %v727
  %979 = vst.msk [vmem:[%s3 + $0x1f8] sm:$0xff] %vm915, %v730
  %980 = vst.msk [vmem:[%s3 + $0x200] sm:$0xff] %vm915, %v733
  %981 = vst.msk [vmem:[%s3 + $0x208] sm:$0xff] %vm915, %v736
  %982 = vst.msk [vmem:[%s3 + $0x210] sm:$0xff] %vm915, %v739
  %983 = vst.msk [vmem:[%s3 + $0x218] sm:$0xff] %vm915, %v742
  %984 = vst.msk [vmem:[%s3 + $0x220] sm:$0xff] %vm915, %v745
  %985 = vst.msk [vmem:[%s3 + $0x228] sm:$0xff] %vm915, %v748
  %986 = vst.msk [vmem:[%s3 + $0x230] sm:$0xff] %vm915, %v751
  %987 = vst.msk [vmem:[%s3 + $0x238] sm:$0xff] %vm915, %v754
  %988 = vst.msk [vmem:[%s3 + $0x240] sm:$0xff] %vm915, %v757
  %989 = vst.msk [vmem:[%s3 + $0x248] sm:$0xff] %vm915, %v760
  %990 = vst.msk [vmem:[%s3 + $0x250] sm:$0xff] %vm915, %v763
  %991 = vst.msk [vmem:[%s3 + $0x258] sm:$0xff] %vm915, %v766
  %992 = vst.msk [vmem:[%s3 + $0x260] sm:$0xff] %vm915, %v769
  %993 = vst.msk [vmem:[%s3 + $0x268] sm:$0xff] %vm915, %v772
  %994 = vst.msk [vmem:[%s3 + $0x270] sm:$0xff] %vm915, %v775
  %995 = vst.msk [vmem:[%s3 + $0x278] sm:$0xff] %vm915, %v778
  %996 = vst.msk [vmem:[%s3 + $0x280] sm:$0xff] %vm915, %v781
  %997 = vst.msk [vmem:[%s3 + $0x288] sm:$0xff] %vm915, %v784
  %998 = vst.msk [vmem:[%s3 + $0x290] sm:$0xff] %vm915, %v787
  %999 = vst.msk [vmem:[%s3 + $0x298] sm:$0xff] %vm915, %v790
  %1000 = vst.msk [vmem:[%s3 + $0x2a0] sm:$0xff] %vm915, %v793
  %1001 = vst.msk [vmem:[%s3 + $0x2a8] sm:$0xff] %vm915, %v796
  %1002 = vst.msk [vmem:[%s3 + $0x2b0] sm:$0xff] %vm915, %v799
  %1003 = vst.msk [vmem:[%s3 + $0x2b8] sm:$0xff] %vm915, %v802
  %1004 = vst.msk [vmem:[%s3 + $0x2c0] sm:$0xff] %vm915, %v805
  %1005 = vst.msk [vmem:[%s3 + $0x2c8] sm:$0xff] %vm915, %v808
  %1006 = vst.msk [vmem:[%s3 + $0x2d0] sm:$0xff] %vm915, %v811
  %1007 = vst.msk [vmem:[%s3 + $0x2d8] sm:$0xff] %vm915, %v814
  %1008 = vst.msk [vmem:[%s3 + $0x2e0] sm:$0xff] %vm915, %v817
  %1009 = vst.msk [vmem:[%s3 + $0x2e8] sm:$0xff] %vm915, %v820
  %1010 = vst.msk [vmem:[%s3 + $0x2f0] sm:$0xff] %vm915, %v823
  %1011 = vst.msk [vmem:[%s3 + $0x2f8] sm:$0xff] %vm915, %v826
  %1012 = vst.msk [vmem:[%s3 + $0x300] sm:$0xff] %vm915, %v829
  %1013 = vst.msk [vmem:[%s3 + $0x308] sm:$0xff] %vm915, %v832
  %1014 = vst.msk [vmem:[%s3 + $0x310] sm:$0xff] %vm915, %v835
  %1015 = vst.msk [vmem:[%s3 + $0x318] sm:$0xff] %vm915, %v838
  %1016 = vst.msk [vmem:[%s3 + $0x320] sm:$0xff] %vm915, %v841
  %1017 = vst.msk [vmem:[%s3 + $0x328] sm:$0xff] %vm915, %v844
  %1018 = vst.msk [vmem:[%s3 + $0x330] sm:$0xff] %vm915, %v847
  %1019 = vst.msk [vmem:[%s3 + $0x338] sm:$0xff] %vm915, %v850
  %1020 = vst.msk [vmem:[%s3 + $0x340] sm:$0xff] %vm915, %v853
  %1021 = vst.msk [vmem:[%s3 + $0x348] sm:$0xff] %vm915, %v856
  %1022 = vst.msk [vmem:[%s3 + $0x350] sm:$0xff] %vm915, %v859
  %1023 = vst.msk [vmem:[%s3 + $0x358] sm:$0xff] %vm915, %v862
  %1024 = vst.msk [vmem:[%s3 + $0x360] sm:$0xff] %vm915, %v865
  %1025 = vst.msk [vmem:[%s3 + $0x368] sm:$0xff] %vm915, %v868
  %1026 = vst.msk [vmem:[%s3 + $0x370] sm:$0xff] %vm915, %v871
  %1027 = vst.msk [vmem:[%s3 + $0x378] sm:$0xff] %vm915, %v874
  %1028 = vst.msk [vmem:[%s3 + $0x380] sm:$0xff] %vm915, %v877
  %1029 = vst.msk [vmem:[%s3 + $0x388] sm:$0xff] %vm915, %v880
  %1030 = vst.msk [vmem:[%s3 + $0x390] sm:$0xff] %vm915, %v883
  %1031 = vst.msk [vmem:[%s3 + $0x398] sm:$0xff] %vm915, %v886
  %1032 = vst.msk [vmem:[%s3 + $0x3a0] sm:$0xff] %vm915, %v889
  %1033 = vst.msk [vmem:[%s3 + $0x3a8] sm:$0xff] %vm915, %v892
  %1034 = vst.msk [vmem:[%s3 + $0x3b0] sm:$0xff] %vm915, %v895
  %1035 = vst.msk [vmem:[%s3 + $0x3b8] sm:$0xff] %vm915, %v898
  %1036 = vst.msk [vmem:[%s3 + $0x3c0] sm:$0xff] %vm915, %v901
  %1037 = vst.msk [vmem:[%s3 + $0x3c8] sm:$0xff] %vm915, %v904
  %1038 = vst.msk [vmem:[%s3 + $0x3d0] sm:$0xff] %vm915, %v907
  %1039 = vst.msk [vmem:[%s3 + $0x3d8] sm:$0xff] %vm915, %v910
  %1040 = vst.msk [vmem:[%s3 + $0x3e0] sm:$0xff] %vm915, %v913
  // Predicated region
  $region14: #{tpu_custom_call.1} parent=0 // pred_check
    _
  $region15: #{tpu_custom_call.1} parent=0 // pred_check_branch
    %1042 = sbr.rel (0) target = $region17
  $region16: #{tpu_custom_call.1} parent=0 // pred_region
    _
  $region17: #{tpu_custom_call.1} parent=0 // pred_fallthru
    _
  // Predicated region
  $region18: #{tpu_custom_call.1} parent=0 // pred_check
    _
  $region19: #{tpu_custom_call.1} parent=0 // pred_check_branch
    %1044 = sbr.rel (0) target = $region21
  $region20: #{tpu_custom_call.1} parent=0 // pred_region
    _
  $region21: #{tpu_custom_call.1} parent=0 // pred_fallthru
    _

</llo_original>
